<compile_context>
chip_gen: v6e
topology: v6e:2x2x1
jax: 0.10.0
libtpu: 0.0.40
codegen_flags: <defaults>
</compile_context>

<pallas_src>
import functools

import jax
import jax.numpy as jnp
from jax.experimental import pallas as pl
from jax.experimental.pallas import tpu as pltpu


def _round_up(x, m):
    return ((x + m - 1) // m) * m


def nn_kernel(x_ref, w1_ref, b1_ref, w2_ref, b2_ref, w3_ref, b3_ref, out_ref,
              *, s_cols, split):
    # fc1 + relu  (bf16 MXU matmul, f32 accumulate, f32 elementwise)
    h = jnp.dot(x_ref[...], w1_ref[...],
                preferred_element_type=jnp.float32) + b1_ref[...]
    h = jnp.maximum(h, 0.0)
    # fc2 + relu
    h = jnp.dot(h.astype(w2_ref.dtype), w2_ref[...],
                preferred_element_type=jnp.float32) + b2_ref[...]
    h = jnp.maximum(h, 0.0)
    # fused heads: one matmul producing the packed [s | t] lane-dense slab
    o = jnp.dot(h.astype(w3_ref.dtype), w3_ref[...],
                preferred_element_type=jnp.float32) + b3_ref[...]

    # tanh only on the 128-aligned sub-slab that contains the s head.
    left = o[:, :split]
    if s_cols % 128 == 0:
        left = jnp.tanh(left)                    # boundary is lane-aligned
    else:
        cols = jax.lax.broadcasted_iota(jnp.int32, left.shape, 1)
        left = jnp.where(cols < s_cols, jnp.tanh(left), left)
    out_ref[:, :split] = left.astype(out_ref.dtype)
    if split < o.shape[1]:                       # static branch
        out_ref[:, split:] = o[:, split:].astype(out_ref.dtype)


@functools.partial(
    jax.jit, static_argnames=("block_batch", "compute_dtype", "out_dtype"))
def nn_forward(x, params, *, block_batch=512, compute_dtype=jnp.bfloat16,
               out_dtype=jnp.bfloat16):
    """params = (w1, b1, w2, b2, w3s, b3s, w3t, b3t).

    Weights are [in, out]; biases are [1, out] (y = x @ W + b, equivalent to
    PyTorch's x @ W.T + b with its [out, in] layout). Returns (s, t) as f32.
    """
    w1, b1, w2, b2, w3s, b3s, w3t, b3t = params
    batch, n_input = x.shape
    n_hidden = w1.shape[1]

    # Lane-dense padded feature dims.
    fpad = _round_up(n_input, 128)            # fc1 input width
    hpad = _round_up(n_hidden, 128)           # hidden width
    ocols = _round_up(2 * n_input, 128)       # packed [s | t] head width
    split = _round_up(n_input, 128)           # 128-aligned boundary holding s

    # Batch tiling: at least 2 grid steps (v7x has 2 TensorCores) and minimal
    # row padding (bpad - batch < g*8 instead of padding to the next 256/512).
    g = max(pl.cdiv(batch, block_batch), 2)
    tb = _round_up(pl.cdiv(batch, g), 8)
    bpad = g * tb

    def pad2(a, r, c, dt):
        out = jnp.zeros((r, c), dt)
        return out.at[:a.shape[0], :a.shape[1]].set(a.astype(dt))

    # Pad + cast fused (jit): bf16 activations/weights, f32 biases.
    xp = pad2(x, bpad, fpad, compute_dtype)
    w1p = pad2(w1, fpad, hpad, compute_dtype)
    w2p = pad2(w2, hpad, hpad, compute_dtype)
    w3p = pad2(jnp.concatenate([w3s, w3t], axis=1), hpad, ocols, compute_dtype)
    b1p = pad2(b1, 1, hpad, jnp.float32)
    b2p = pad2(b2, 1, hpad, jnp.float32)
    b3p = pad2(jnp.concatenate([b3s, b3t], axis=1), 1, ocols, jnp.float32)

    # VMEM budget from the actual footprint (resident weights + double-buffered
    # activation tiles + f32 intermediates), clamped to fit v7x's 64 MiB VMEM.
    cbytes = jnp.dtype(compute_dtype).itemsize
    obytes = jnp.dtype(out_dtype).itemsize
    resident = ((fpad * hpad + hpad * hpad + hpad * ocols) * cbytes
                + (2 * hpad + ocols) * 4)
    per_step = tb * fpad * cbytes + tb * ocols * obytes
    scratch = tb * (hpad + ocols) * 4
    vmem_need = 2 * (resident + per_step + scratch)
    vmem_limit = int(min(max(vmem_need + (4 << 20), 16 << 20), 60 << 20))

    flops = 2 * bpad * (fpad * hpad + hpad * hpad + hpad * ocols)
    bytes_accessed = sum(int(a.size) * a.dtype.itemsize
                         for a in (xp, w1p, b1p, w2p, b2p, w3p, b3p))
    bytes_accessed += bpad * ocols * obytes

    kernel = functools.partial(nn_kernel, s_cols=n_input, split=split)

    out = pl.pallas_call(
        kernel,
        out_shape=jax.ShapeDtypeStruct((bpad, ocols), out_dtype),
        grid_spec=pltpu.PrefetchScalarGridSpec(
            num_scalar_prefetch=0,
            grid=(g,),
            in_specs=[
                pl.BlockSpec((tb, fpad), lambda i: (i, 0)),      # x tile
                pl.BlockSpec((fpad, hpad), lambda i: (0, 0)),    # w1 (resident)
                pl.BlockSpec((1, hpad), lambda i: (0, 0)),       # b1
                pl.BlockSpec((hpad, hpad), lambda i: (0, 0)),    # w2
                pl.BlockSpec((1, hpad), lambda i: (0, 0)),       # b2
                pl.BlockSpec((hpad, ocols), lambda i: (0, 0)),   # fused [w3s|w3t]
                pl.BlockSpec((1, ocols), lambda i: (0, 0)),      # fused [b3s|b3t]
            ],
            out_specs=pl.BlockSpec((tb, ocols), lambda i: (i, 0)),
        ),
        compiler_params=pltpu.CompilerParams(
            dimension_semantics=("parallel",),   # megacore / v7x 2-TC split
            vmem_limit_bytes=vmem_limit,
        ),
        cost_estimate=pl.CostEstimate(
            flops=flops,
            transcendentals=bpad * split,
            bytes_accessed=bytes_accessed,
        ),
    )(xp, w1p, b1p, w2p, b2p, w3p, b3p)

    s = out[:batch, :n_input].astype(jnp.float32)
    t = out[:batch, n_input:2 * n_input].astype(jnp.float32)
    return s, t


def init_params(key, n_input, n_hidden, dtype=jnp.float32):
    """PyTorch-style uniform(-1/sqrt(fan_in), 1/sqrt(fan_in)) init."""
    keys = jax.random.split(key, 8)

    def linear(kw, kb, fan_in, fan_out):
        bound = 1.0 / jnp.sqrt(float(fan_in))
        w = jax.random.uniform(kw, (fan_in, fan_out), dtype, -bound, bound)
        b = jax.random.uniform(kb, (1, fan_out), dtype, -bound, bound)
        return w, b

    w1, b1 = linear(keys[0], keys[1], n_input, n_hidden)
    w2, b2 = linear(keys[2], keys[3], n_hidden, n_hidden)
    w3s, b3s = linear(keys[4], keys[5], n_hidden, n_input)
    w3t, b3t = linear(keys[6], keys[7], n_hidden, n_input)
    return (w1, b1, w2, b2, w3s, b3s, w3t, b3t)


if __name__ == "__main__":
    n_input, n_hidden, batch = 16, 32, 300   # exercises padding + 2 grid steps
    key = jax.random.PRNGKey(0)
    k_x, k_p = jax.random.split(key)
    x = jax.random.normal(k_x, (batch, n_input), jnp.float32)
    params = init_params(k_p, n_input, n_hidden)

    s, t = nn_forward(x, params)
    jax.block_until_ready((s, t))

    # Pure-JAX reference with the same bf16 quantization / f32 accumulation.
    w1, b1, w2, b2, w3s, b3s, w3t, b3t = params

    def q(a):
        return a.astype(jnp.bfloat16).astype(jnp.float32)

    h = jnp.maximum(q(x) @ q(w1) + b1, 0.0)
    h = jnp.maximum(q(h) @ q(w2) + b2, 0.0)
    s_ref = jnp.tanh(q(h) @ q(w3s) + b3s)
    t_ref = q(h) @ q(w3t) + b3t

    assert s.shape == (batch, n_input) and t.shape == (batch, n_input)
    assert jnp.allclose(s, s_ref, atol=2e-2, rtol=2e-2), "s mismatch"
    assert jnp.allclose(t, t_ref, atol=2e-2, rtol=2e-2), "t mismatch"

    print("KERNEL_OK")
</pallas_src>

<mosaic_0001>
module attributes {stable_mosaic.version = 11 : i64} {
  func.func @nn_kernel(%arg0: i32, %arg1: memref<152x128xbf16, #tpu.memory_space<vmem>>, %arg2: memref<128x128xbf16, #tpu.memory_space<vmem>>, %arg3: memref<1x128xf32, #tpu.memory_space<vmem>>, %arg4: memref<128x128xbf16, #tpu.memory_space<vmem>>, %arg5: memref<1x128xf32, #tpu.memory_space<vmem>>, %arg6: memref<128x128xbf16, #tpu.memory_space<vmem>>, %arg7: memref<1x128xf32, #tpu.memory_space<vmem>>, %arg8: memref<152x128xbf16, #tpu.memory_space<vmem>>) attributes {dimension_semantics = [#tpu.dimension_semantics<parallel>], iteration_bounds = array<i64: 2>, scalar_prefetch = 0 : i64, scratch_operands = 0 : i64, tpu.core_type = #tpu.core_type<tc>, window_params = [{transform_indices = @transform_0, window_bounds = array<i64: 152, 128>}, {pipeline_mode = #tpu.pipeline_mode<synchronous>, transform_indices = @transform_1, window_bounds = array<i64: 128, 128>}, {pipeline_mode = #tpu.pipeline_mode<synchronous>, transform_indices = @transform_2, window_bounds = array<i64: 1, 128>}, {pipeline_mode = #tpu.pipeline_mode<synchronous>, transform_indices = @transform_3, window_bounds = array<i64: 128, 128>}, {pipeline_mode = #tpu.pipeline_mode<synchronous>, transform_indices = @transform_4, window_bounds = array<i64: 1, 128>}, {pipeline_mode = #tpu.pipeline_mode<synchronous>, transform_indices = @transform_5, window_bounds = array<i64: 128, 128>}, {pipeline_mode = #tpu.pipeline_mode<synchronous>, transform_indices = @transform_6, window_bounds = array<i64: 1, 128>}, {transform_indices = @transform_7, window_bounds = array<i64: 152, 128>}]} {
    %c0 = arith.constant 0 : index
    %c0_0 = arith.constant 0 : index
    %0 = vector.load %arg1[%c0, %c0_0] : memref<152x128xbf16, #tpu.memory_space<vmem>>, vector<152x128xbf16>
    %c0_1 = arith.constant 0 : index
    %c0_2 = arith.constant 0 : index
    %1 = vector.load %arg2[%c0_1, %c0_2] : memref<128x128xbf16, #tpu.memory_space<vmem>>, vector<128x128xbf16>
    %cst = arith.constant dense<0.000000e+00> : vector<152x128xf32>
    %2 = tpu.matmul %0, %1, %cst {dimension_numbers = #tpu.dot_dimension_numbers<[1], [0], [0], [1], [0, 0, 1, 1], [], []>} : vector<152x128xbf16>, vector<128x128xbf16>, vector<152x128xf32> -> vector<152x128xf32>
    %c0_3 = arith.constant 0 : index
    %c0_4 = arith.constant 0 : index
    %3 = vector.load %arg3[%c0_3, %c0_4] : memref<1x128xf32, #tpu.memory_space<vmem>>, vector<1x128xf32>
    %4 = vector.broadcast %3 : vector<1x128xf32> to vector<152x128xf32>
    %5 = arith.addf %2, %4 : vector<152x128xf32>
    %cst_5 = arith.constant 0.000000e+00 : f32
    %6 = vector.broadcast %cst_5 : f32 to vector<152x128xf32>
    %7 = arith.maximumf %5, %6 : vector<152x128xf32>
    %8 = arith.truncf %7 : vector<152x128xf32> to vector<152x128xbf16>
    %c0_6 = arith.constant 0 : index
    %c0_7 = arith.constant 0 : index
    %9 = vector.load %arg4[%c0_6, %c0_7] : memref<128x128xbf16, #tpu.memory_space<vmem>>, vector<128x128xbf16>
    %cst_8 = arith.constant dense<0.000000e+00> : vector<152x128xf32>
    %10 = tpu.matmul %8, %9, %cst_8 {dimension_numbers = #tpu.dot_dimension_numbers<[1], [0], [0], [1], [0, 0, 1, 1], [], []>} : vector<152x128xbf16>, vector<128x128xbf16>, vector<152x128xf32> -> vector<152x128xf32>
    %c0_9 = arith.constant 0 : index
    %c0_10 = arith.constant 0 : index
    %11 = vector.load %arg5[%c0_9, %c0_10] : memref<1x128xf32, #tpu.memory_space<vmem>>, vector<1x128xf32>
    %12 = vector.broadcast %11 : vector<1x128xf32> to vector<152x128xf32>
    %13 = arith.addf %10, %12 : vector<152x128xf32>
    %cst_11 = arith.constant 0.000000e+00 : f32
    %14 = vector.broadcast %cst_11 : f32 to vector<152x128xf32>
    %15 = arith.maximumf %13, %14 : vector<152x128xf32>
    %16 = arith.truncf %15 : vector<152x128xf32> to vector<152x128xbf16>
    %c0_12 = arith.constant 0 : index
    %c0_13 = arith.constant 0 : index
    %17 = vector.load %arg6[%c0_12, %c0_13] : memref<128x128xbf16, #tpu.memory_space<vmem>>, vector<128x128xbf16>
    %cst_14 = arith.constant dense<0.000000e+00> : vector<152x128xf32>
    %18 = tpu.matmul %16, %17, %cst_14 {dimension_numbers = #tpu.dot_dimension_numbers<[1], [0], [0], [1], [0, 0, 1, 1], [], []>} : vector<152x128xbf16>, vector<128x128xbf16>, vector<152x128xf32> -> vector<152x128xf32>
    %c0_15 = arith.constant 0 : index
    %c0_16 = arith.constant 0 : index
    %19 = vector.load %arg7[%c0_15, %c0_16] : memref<1x128xf32, #tpu.memory_space<vmem>>, vector<1x128xf32>
    %20 = vector.broadcast %19 : vector<1x128xf32> to vector<152x128xf32>
    %21 = arith.addf %18, %20 : vector<152x128xf32>
    %22 = tpu.iota {dimensions = array<i32: 1>} : vector<152x128xi32>
    %c16_i32 = arith.constant 16 : i32
    %23 = vector.broadcast %c16_i32 : i32 to vector<152x128xi32>
    %24 = arith.cmpi slt, %22, %23 : vector<152x128xi32>
    %25 = math.tanh %21 : vector<152x128xf32>
    %26 = arith.select %24, %25, %21 : vector<152x128xi1>, vector<152x128xf32>
    %27 = arith.truncf %26 : vector<152x128xf32> to vector<152x128xbf16>
    %c0_17 = arith.constant 0 : index
    %c0_18 = arith.constant 0 : index
    %28 = vector.load %arg8[%c0_17, %c0_18] : memref<152x128xbf16, #tpu.memory_space<vmem>>, vector<152x128xbf16>
    tpu.vector_store %arg8[%c0_17, %c0_18], %27 {strides = array<i32>} : memref<152x128xbf16, #tpu.memory_space<vmem>>, vector<152x128xbf16>,
    return
  }
  func.func @transform_0(%arg0: i32) -> (i32, i32) {
    %c0_i32 = arith.constant 0 : i32
    %c0_i32_0 = arith.constant 0 : i32
    return %arg0, %c0_i32 : i32, i32
  }
  func.func @transform_1(%arg0: i32) -> (i32, i32) {
    %c0_i32 = arith.constant 0 : i32
    %c0_i32_0 = arith.constant 0 : i32
    %c0_i32_1 = arith.constant 0 : i32
    return %c0_i32, %c0_i32_0 : i32, i32
  }
  func.func @transform_2(%arg0: i32) -> (i32, i32) {
    %c0_i32 = arith.constant 0 : i32
    %c0_i32_0 = arith.constant 0 : i32
    %c0_i32_1 = arith.constant 0 : i32
    return %c0_i32, %c0_i32_0 : i32, i32
  }
  func.func @transform_3(%arg0: i32) -> (i32, i32) {
    %c0_i32 = arith.constant 0 : i32
    %c0_i32_0 = arith.constant 0 : i32
    %c0_i32_1 = arith.constant 0 : i32
    return %c0_i32, %c0_i32_0 : i32, i32
  }
  func.func @transform_4(%arg0: i32) -> (i32, i32) {
    %c0_i32 = arith.constant 0 : i32
    %c0_i32_0 = arith.constant 0 : i32
    %c0_i32_1 = arith.constant 0 : i32
    return %c0_i32, %c0_i32_0 : i32, i32
  }
  func.func @transform_5(%arg0: i32) -> (i32, i32) {
    %c0_i32 = arith.constant 0 : i32
    %c0_i32_0 = arith.constant 0 : i32
    %c0_i32_1 = arith.constant 0 : i32
    return %c0_i32, %c0_i32_0 : i32, i32
  }
  func.func @transform_6(%arg0: i32) -> (i32, i32) {
    %c0_i32 = arith.constant 0 : i32
    %c0_i32_0 = arith.constant 0 : i32
    %c0_i32_1 = arith.constant 0 : i32
    return %c0_i32, %c0_i32_0 : i32, i32
  }
  func.func @transform_7(%arg0: i32) -> (i32, i32) {
    %c0_i32 = arith.constant 0 : i32
    %c0_i32_0 = arith.constant 0 : i32
    return %arg0, %c0_i32 : i32, i32
  }
}

</mosaic_0001>

<llo_original>
// kernel: nn_forward.1
$region0: #{nn_forward.1}
  #allocation0 [shape = 'u32[]', space=smem, size = 0x4, offset = 0x4, fixed_abs, tag = 'smem constant byte address 0x4 - core index']
  #allocation1 [shape = 'u32[144,128]{1,0:T(1,128)}', space=vmem, size = 0x12000, scoped, tag = 'internal scratch']
  %s0 = inlined_call_operand.vmem [shape: bf16[304,128], index: 0, kind: input, shape index: {}]
  %s1 = inlined_call_operand.vmem [shape: bf16[128,128], index: 1, kind: input, shape index: {}]
  %s2 = inlined_call_operand.vmem [shape: f32[1,128], index: 2, kind: input, shape index: {}]
  %s3 = inlined_call_operand.vmem [shape: bf16[128,128], index: 3, kind: input, shape index: {}]
  %s4 = inlined_call_operand.vmem [shape: f32[1,128], index: 4, kind: input, shape index: {}]
  %s5 = inlined_call_operand.vmem [shape: bf16[128,128], index: 5, kind: input, shape index: {}]
  %s6 = inlined_call_operand.vmem [shape: f32[1,128], index: 6, kind: input, shape index: {}]
  %s7 = inlined_call_operand.vmem [shape: bf16[304,128], index: 7, kind: output, shape index: {}]
  %s8 = sld [smem:[#allocation0]]
  $region61: #{nn_forward.1} parent=0
    _
  %s10 = ssub.s32 1, %s8
  %s11 = scalar_select 0, %s10, %s8
  loop: start=0, step=1, limit=4
  $region2: #{nn_forward.1} parent=0 // loop_pre_header
    _
  $region3: #{nn_forward.1} parent=0 // loop_header
    %s13 = sphi 0, %s17
    %p14 = scmp.ge.s32.totalorder %s13, 4
    %s23 = sphi 0, %s25
    %s26 = sphi 0, %s23
    %s27 = sphi 0, %s26
    %s43 = sphi 0, %s27
    %s47 = sphi 0, %s47
    %s49 = sphi 0, %s47
    %s50 = sphi 0, %s49
    %s64 = sphi 0, %s50
    %s68 = sphi 0, %s68
    %s70 = sphi 0, %s68
    %s71 = sphi 0, %s70
    %s85 = sphi 0, %s71
    %s89 = sphi 0, %s89
    %s91 = sphi 0, %s89
    %s92 = sphi 0, %s91
    %s106 = sphi 0, %s92
    %s110 = sphi 0, %s110
    %s112 = sphi 0, %s110
    %s113 = sphi 0, %s112
    %s127 = sphi 0, %s113
    %s131 = sphi 0, %s131
    %s133 = sphi 0, %s131
    %s134 = sphi 0, %s133
    %s148 = sphi 0, %s134
    %s152 = sphi 0, %s152
    %s154 = sphi 0, %s152
    %s155 = sphi 0, %s154
    %s169 = sphi 0, %s155
    %s175 = sphi 0, %s177
    %s178 = sphi 0, %s175
    %s179 = sphi 0, %s178
    %s195 = sphi 0, %s179
  $region4: #{nn_forward.1} parent=0 // loop_header_branch
    %16 = sbr.rel (%p14) target = $region8
  $region5: #{nn_forward.1} parent=0 // loop_body
    %s18 = ssub.s32 %s13, 1
    %s19 = ssub.s32 %s13, 2
    %s20 = sadd.s32 %s13, 1
    %s21 = ssub.s32 %s13, %s20
    %p22 = scmp.eq.s32.totalorder %s21, 0
    %s24 = sadd.s32 %s23, 1
    %s25 = scalar_select %p22, %s23, %s24
    %p28 = pneg %p22
    %p29 = scmp.eq.s32.totalorder %s13, 1
    %p30 = por %p28, %p29
    %p31 = scmp.ne.s32.totalorder %s23, %s26
    %p32 = scmp.eq.s32.totalorder %s13, 0
    %p33 = por %p31, %p32
    %p34 = scmp.ne.s32.totalorder %s23, %s26
    %p35 = scmp.eq.s32.totalorder %s18, 1
    %p36 = por %p34, %p35
    %p37 = scmp.ne.s32.totalorder %s26, %s27
    %p38 = scmp.eq.s32.totalorder %s18, 0
    %p39 = por %p37, %p38
    %p40 = scmp.ne.s32.totalorder %s26, %s27
    %p41 = scmp.eq.s32.totalorder %s19, 1
    %p42 = por %p40, %p41
    %p44 = scmp.ne.s32.totalorder %s27, %s43
    %p45 = scmp.eq.s32.totalorder %s19, 0
    %p46 = por %p44, %p45
    %s48 = sadd.s32 %s47, 1
    %p51 = scmp.eq.s32.totalorder %s13, 1
    %p52 = scmp.ne.s32.totalorder %s47, %s49
    %p53 = scmp.eq.s32.totalorder %s13, 0
    %p54 = por %p52, %p53
    %p55 = scmp.ne.s32.totalorder %s47, %s49
    %p56 = scmp.eq.s32.totalorder %s18, 1
    %p57 = por %p55, %p56
    %p58 = scmp.ne.s32.totalorder %s49, %s50
    %p59 = scmp.eq.s32.totalorder %s18, 0
    %p60 = por %p58, %p59
    %p61 = scmp.ne.s32.totalorder %s49, %s50
    %p62 = scmp.eq.s32.totalorder %s19, 1
    %p63 = por %p61, %p62
    %p65 = scmp.ne.s32.totalorder %s50, %s64
    %p66 = scmp.eq.s32.totalorder %s19, 0
    %p67 = por %p65, %p66
    %s69 = sadd.s32 %s68, 1
    %p72 = scmp.eq.s32.totalorder %s13, 1
    %p73 = scmp.ne.s32.totalorder %s68, %s70
    %p74 = scmp.eq.s32.totalorder %s13, 0
    %p75 = por %p73, %p74
    %p76 = scmp.ne.s32.totalorder %s68, %s70
    %p77 = scmp.eq.s32.totalorder %s18, 1
    %p78 = por %p76, %p77
    %p79 = scmp.ne.s32.totalorder %s70, %s71
    %p80 = scmp.eq.s32.totalorder %s18, 0
    %p81 = por %p79, %p80
    %p82 = scmp.ne.s32.totalorder %s70, %s71
    %p83 = scmp.eq.s32.totalorder %s19, 1
    %p84 = por %p82, %p83
    %p86 = scmp.ne.s32.totalorder %s71, %s85
    %p87 = scmp.eq.s32.totalorder %s19, 0
    %p88 = por %p86, %p87
    %s90 = sadd.s32 %s89, 1
    %p93 = scmp.eq.s32.totalorder %s13, 1
    %p94 = scmp.ne.s32.totalorder %s89, %s91
    %p95 = scmp.eq.s32.totalorder %s13, 0
    %p96 = por %p94, %p95
    %p97 = scmp.ne.s32.totalorder %s89, %s91
    %p98 = scmp.eq.s32.totalorder %s18, 1
    %p99 = por %p97, %p98
    %p100 = scmp.ne.s32.totalorder %s91, %s92
    %p101 = scmp.eq.s32.totalorder %s18, 0
    %p102 = por %p100, %p101
    %p103 = scmp.ne.s32.totalorder %s91, %s92
    %p104 = scmp.eq.s32.totalorder %s19, 1
    %p105 = por %p103, %p104
    %p107 = scmp.ne.s32.totalorder %s92, %s106
    %p108 = scmp.eq.s32.totalorder %s19, 0
    %p109 = por %p107, %p108
    %s111 = sadd.s32 %s110, 1
    %p114 = scmp.eq.s32.totalorder %s13, 1
    %p115 = scmp.ne.s32.totalorder %s110, %s112
    %p116 = scmp.eq.s32.totalorder %s13, 0
    %p117 = por %p115, %p116
    %p118 = scmp.ne.s32.totalorder %s110, %s112
    %p119 = scmp.eq.s32.totalorder %s18, 1
    %p120 = por %p118, %p119
    %p121 = scmp.ne.s32.totalorder %s112, %s113
    %p122 = scmp.eq.s32.totalorder %s18, 0
    %p123 = por %p121, %p122
    %p124 = scmp.ne.s32.totalorder %s112, %s113
    %p125 = scmp.eq.s32.totalorder %s19, 1
    %p126 = por %p124, %p125
    %p128 = scmp.ne.s32.totalorder %s113, %s127
    %p129 = scmp.eq.s32.totalorder %s19, 0
    %p130 = por %p128, %p129
    %s132 = sadd.s32 %s131, 1
    %p135 = scmp.eq.s32.totalorder %s13, 1
    %p136 = scmp.ne.s32.totalorder %s131, %s133
    %p137 = scmp.eq.s32.totalorder %s13, 0
    %p138 = por %p136, %p137
    %p139 = scmp.ne.s32.totalorder %s131, %s133
    %p140 = scmp.eq.s32.totalorder %s18, 1
    %p141 = por %p139, %p140
    %p142 = scmp.ne.s32.totalorder %s133, %s134
    %p143 = scmp.eq.s32.totalorder %s18, 0
    %p144 = por %p142, %p143
    %p145 = scmp.ne.s32.totalorder %s133, %s134
    %p146 = scmp.eq.s32.totalorder %s19, 1
    %p147 = por %p145, %p146
    %p149 = scmp.ne.s32.totalorder %s134, %s148
    %p150 = scmp.eq.s32.totalorder %s19, 0
    %p151 = por %p149, %p150
    %s153 = sadd.s32 %s152, 1
    %p156 = scmp.eq.s32.totalorder %s13, 1
    %p157 = scmp.ne.s32.totalorder %s152, %s154
    %p158 = scmp.eq.s32.totalorder %s13, 0
    %p159 = por %p157, %p158
    %p160 = scmp.ne.s32.totalorder %s152, %s154
    %p161 = scmp.eq.s32.totalorder %s18, 1
    %p162 = por %p160, %p161
    %p163 = scmp.ne.s32.totalorder %s154, %s155
    %p164 = scmp.eq.s32.totalorder %s18, 0
    %p165 = por %p163, %p164
    %p166 = scmp.ne.s32.totalorder %s154, %s155
    %p167 = scmp.eq.s32.totalorder %s19, 1
    %p168 = por %p166, %p167
    %p170 = scmp.ne.s32.totalorder %s155, %s169
    %p171 = scmp.eq.s32.totalorder %s19, 0
    %p172 = por %p170, %p171
    %s173 = ssub.s32 %s13, %s20
    %p174 = scmp.eq.s32.totalorder %s173, 0
    %s176 = sadd.s32 %s175, 1
    %s177 = scalar_select %p174, %s175, %s176
    %p180 = pneg %p174
    %p181 = scmp.eq.s32.totalorder %s13, 1
    %p182 = por %p180, %p181
    %p183 = scmp.ne.s32.totalorder %s175, %s178
    %p184 = scmp.eq.s32.totalorder %s13, 0
    %p185 = por %p183, %p184
    %p186 = scmp.ne.s32.totalorder %s175, %s178
    %p187 = scmp.eq.s32.totalorder %s18, 1
    %p188 = por %p186, %p187
    %p189 = scmp.ne.s32.totalorder %s178, %s179
    %p190 = scmp.eq.s32.totalorder %s18, 0
    %p191 = por %p189, %p190
    %p192 = scmp.ne.s32.totalorder %s178, %s179
    %p193 = scmp.eq.s32.totalorder %s19, 1
    %p194 = por %p192, %p193
    %p196 = scmp.ne.s32.totalorder %s179, %s195
    %p197 = scmp.eq.s32.totalorder %s19, 0
    %p198 = por %p196, %p197
    %p199 = scmp.le.s32.totalorder 1, %s13
    %p200 = scmp.lt.s32.totalorder %s13, 3
    %p201 = pnand %p199, %p200
    %p202 = pneg %p201
    // Predicated region
    $region9: #{nn_forward.1} parent=5 // pred_check
      _
    $region10: #{nn_forward.1} parent=5 // pred_check_branch
      %204 = sbr.rel (%p201) target = $region12
    $region11: #{nn_forward.1} parent=5 // pred_region
      %s205 = ssub.s32 %s13, 1
      // Predicated region
      $region13: #{nn_forward.1} parent=11 // pred_check
        %p206 = pneg %p60
      $region14: #{nn_forward.1} parent=11 // pred_check_branch
        %208 = sbr.rel (%p206) target = $region16
      $region15: #{nn_forward.1} parent=11 // pred_region
        _
      $region16: #{nn_forward.1} parent=11 // pred_fallthru
        _
      // Predicated region
      $region17: #{nn_forward.1} parent=11 // pred_check
        %p209 = pneg %p81
      $region18: #{nn_forward.1} parent=11 // pred_check_branch
        %211 = sbr.rel (%p209) target = $region20
      $region19: #{nn_forward.1} parent=11 // pred_region
        _
      $region20: #{nn_forward.1} parent=11 // pred_fallthru
        _
      // Predicated region
      $region21: #{nn_forward.1} parent=11 // pred_check
        %p212 = pneg %p102
      $region22: #{nn_forward.1} parent=11 // pred_check_branch
        %214 = sbr.rel (%p212) target = $region24
      $region23: #{nn_forward.1} parent=11 // pred_region
        _
      $region24: #{nn_forward.1} parent=11 // pred_fallthru
        _
      // Predicated region
      $region25: #{nn_forward.1} parent=11 // pred_check
        %p215 = pneg %p123
      $region26: #{nn_forward.1} parent=11 // pred_check_branch
        %217 = sbr.rel (%p215) target = $region28
      $region27: #{nn_forward.1} parent=11 // pred_region
        _
      $region28: #{nn_forward.1} parent=11 // pred_fallthru
        _
      // Predicated region
      $region29: #{nn_forward.1} parent=11 // pred_check
        %p218 = pneg %p144
      $region30: #{nn_forward.1} parent=11 // pred_check_branch
        %220 = sbr.rel (%p218) target = $region32
      $region31: #{nn_forward.1} parent=11 // pred_region
        _
      $region32: #{nn_forward.1} parent=11 // pred_fallthru
        _
      // Predicated region
      $region33: #{nn_forward.1} parent=11 // pred_check
        %p221 = pneg %p165
      $region34: #{nn_forward.1} parent=11 // pred_check_branch
        %223 = sbr.rel (%p221) target = $region36
      $region35: #{nn_forward.1} parent=11 // pred_region
        _
      $region36: #{nn_forward.1} parent=11 // pred_fallthru
        _
    $region12: #{nn_forward.1} parent=5 // pred_fallthru
      _
    %p224 = scmp.lt.s32.totalorder %s13, 2
    // Predicated region
    $region37: #{nn_forward.1} parent=5 // pred_check
      %p225 = pneg %p224
    $region38: #{nn_forward.1} parent=5 // pred_check_branch
      %227 = sbr.rel (%p225) target = $region40
    $region39: #{nn_forward.1} parent=5 // pred_region
      // Predicated region
      $region41: #{nn_forward.1} parent=39 // pred_check
        %p228 = pneg %p33
      $region42: #{nn_forward.1} parent=39 // pred_check_branch
        %230 = sbr.rel (%p228) target = $region44
      $region43: #{nn_forward.1} parent=39 // pred_region
        %s231 = smul.u32 19, %s13
        %p232 = scmp.lt.s32.totalorder %s231, 37
        %s233 = scalar_select %p232, %s231, 37
        %s234 = smul.addr %s233, 4
        %s235 = scalar_lea.vmem %s0, %s234
        %s236 = smul.u32 19, %s13
      $region44: #{nn_forward.1} parent=39 // pred_fallthru
        _
    $region40: #{nn_forward.1} parent=5 // pred_fallthru
      _
    %p237 = scmp.le.s32.totalorder 1, %s13
    %p238 = scmp.lt.s32.totalorder %s13, 3
    %p239 = pnand %p237, %p238
    %p240 = pneg %p239
    // Predicated region
    $region45: #{nn_forward.1} parent=5 // pred_check
      _
    $region46: #{nn_forward.1} parent=5 // pred_check_branch
      %242 = sbr.rel (%p239) target = $region48
    $region47: #{nn_forward.1} parent=5 // pred_region
      %s243 = ssub.s32 %s13, 1
      %s244 = smul.u32 19, %s18
      %p245 = scmp.lt.s32.totalorder %s244, 37
      %s246 = scalar_select %p245, %s244, 37
      %s247 = smul.addr %s246, 4
      %s248 = scalar_lea.vmem %s0, %s247
      %p249 = pneg %p39
      %p250 = pneg %p36
      %p251 = pneg %p60
      %p252 = pneg %p57
      %p253 = pneg %p81
      %p254 = pneg %p78
      %p255 = pneg %p102
      %p256 = pneg %p99
      %p257 = pneg %p123
      %p258 = pneg %p120
      %p259 = pneg %p144
      %p260 = pneg %p141
      %p261 = pneg %p165
      %p262 = pneg %p162
      %p263 = pneg %p191
      %p264 = pneg %p188
      %s265 = smul.u32 19, %s18
      %p266 = scmp.lt.s32.totalorder %s265, 37
      %s267 = scalar_select %p266, %s265, 37
      %s268 = smul.addr %s267, 4
      %s269 = scalar_lea.vmem %s7, %s268
      %s270 = smul.u32 19, %s18
      %p271 = scmp.lt.s32.totalorder %s270, 37
      %s272 = scalar_select %p271, %s270, 37
      %s273 = smul.addr %s272, 4
      %s274 = scalar_lea.vmem %s0, %s273
      %s275 = smul.u32 19, %s18
      %s276 = smul.u32 19, %s18
      %p277 = scmp.lt.s32.totalorder %s276, 37
      %s278 = scalar_select %p277, %s276, 37
      %s279 = smul.addr %s278, 4
      %s280 = scalar_lea.vmem %s7, %s279
      %s281 = smul.u32 19, %s18
      %v283 = vld [vmem:[%s274] sm:$0xf]
      %v284 = vld [vmem:[%s274 + $0x4] sm:$0xf]
      %v285 = vld [vmem:[%s274 + $0x8] sm:$0xf]
      %v286 = vld [vmem:[%s274 + $0xc] sm:$0xf]
      %v287 = vld [vmem:[%s274 + $0x10] sm:$0xf]
      %v288 = vld [vmem:[%s274 + $0x14] sm:$0xf]
      %v289 = vld [vmem:[%s274 + $0x18] sm:$0xf]
      %v290 = vld [vmem:[%s274 + $0x1c] sm:$0xf]
      %v291 = vld [vmem:[%s274 + $0x20] sm:$0xf]
      %v292 = vld [vmem:[%s274 + $0x24] sm:$0xf]
      %v293 = vld [vmem:[%s274 + $0x28] sm:$0xf]
      %v294 = vld [vmem:[%s274 + $0x2c] sm:$0xf]
      %v295 = vld [vmem:[%s274 + $0x30] sm:$0xf]
      %v296 = vld [vmem:[%s274 + $0x34] sm:$0xf]
      %v297 = vld [vmem:[%s274 + $0x38] sm:$0xf]
      %v298 = vld [vmem:[%s274 + $0x3c] sm:$0xf]
      %v299 = vld [vmem:[%s274 + $0x40] sm:$0xf]
      %v300 = vld [vmem:[%s274 + $0x44] sm:$0xf]
      %v301 = vld [vmem:[%s274 + $0x48] sm:$0xf]
      %v302 = vld [vmem:[%s1] sm:$0xf]
      %v303 = vld [vmem:[%s1 + $0x4] sm:$0xf]
      %v304 = vld [vmem:[%s1 + $0x8] sm:$0xf]
      %v305 = vld [vmem:[%s1 + $0xc] sm:$0xf]
      %v306 = vld [vmem:[%s1 + $0x10] sm:$0xf]
      %v307 = vld [vmem:[%s1 + $0x14] sm:$0xf]
      %v308 = vld [vmem:[%s1 + $0x18] sm:$0xf]
      %v309 = vld [vmem:[%s1 + $0x1c] sm:$0xf]
      %v310 = vld [vmem:[%s1 + $0x20] sm:$0xf]
      %v311 = vld [vmem:[%s1 + $0x24] sm:$0xf]
      %v312 = vld [vmem:[%s1 + $0x28] sm:$0xf]
      %v313 = vld [vmem:[%s1 + $0x2c] sm:$0xf]
      %v314 = vld [vmem:[%s1 + $0x30] sm:$0xf]
      %v315 = vld [vmem:[%s1 + $0x34] sm:$0xf]
      %v316 = vld [vmem:[%s1 + $0x38] sm:$0xf]
      %v317 = vld [vmem:[%s1 + $0x3c] sm:$0xf]
      %v318 = vld [vmem:[%s2] sm:$0x1]
      %v320 = vlaneseq
      %v321 = vshrl.u32 %v320, 7
      %v322 = vsub.s32 0, %v321
      %v323 = vrot.slane %v318, %v322
      %v344 = vunpack.c.l.b16 %v283
      %v345 = vunpack.c.l.b16 %v284
      %v346 = vunpack.c.l.b16 %v285
      %v347 = vunpack.c.l.b16 %v286
      %v348 = vunpack.c.l.b16 %v287
      %v349 = vunpack.c.l.b16 %v288
      %v350 = vunpack.c.l.b16 %v289
      %v351 = vunpack.c.l.b16 %v290
      %v352 = vunpack.c.l.b16 %v291
      %v353 = vunpack.c.l.b16 %v292
      %v354 = vunpack.c.l.b16 %v293
      %v355 = vunpack.c.l.b16 %v294
      %v356 = vunpack.c.l.b16 %v295
      %v357 = vunpack.c.l.b16 %v296
      %v358 = vunpack.c.l.b16 %v297
      %v359 = vunpack.c.l.b16 %v298
      %v360 = vunpack.c.l.b16 %v299
      %v361 = vunpack.c.l.b16 %v300
      %v362 = vunpack.c.l.b16 %v301
      %v363 = vpack.c.b16 %v345, %v344
      %v364 = vpack.c.b16 %v347, %v346
      %v365 = vpack.c.b16 %v349, %v348
      %v366 = vpack.c.b16 %v351, %v350
      %v367 = vpack.c.b16 %v353, %v352
      %v368 = vpack.c.b16 %v355, %v354
      %v369 = vpack.c.b16 %v357, %v356
      %v370 = vpack.c.b16 %v359, %v358
      %v371 = vpack.c.b16 %v361, %v360
      %v372 = vpack.c.b16 %v362, %v362
      %v399 = vunpack.c.l.b16 %v302
      %v400 = vunpack.c.l.b16 %v303
      %v401 = vunpack.c.l.b16 %v304
      %v402 = vunpack.c.l.b16 %v305
      %v403 = vunpack.c.l.b16 %v306
      %v404 = vunpack.c.l.b16 %v307
      %v405 = vunpack.c.l.b16 %v308
      %v406 = vunpack.c.l.b16 %v309
      %v407 = vunpack.c.l.b16 %v310
      %v408 = vunpack.c.l.b16 %v311
      %v409 = vunpack.c.l.b16 %v312
      %v410 = vunpack.c.l.b16 %v313
      %v411 = vunpack.c.l.b16 %v314
      %v412 = vunpack.c.l.b16 %v315
      %v413 = vunpack.c.l.b16 %v316
      %v414 = vunpack.c.l.b16 %v317
      %v415 = vpack.c.b16 %v400, %v399
      %v416 = vpack.c.b16 %v402, %v401
      %v417 = vpack.c.b16 %v404, %v403
      %v418 = vpack.c.b16 %v406, %v405
      %v419 = vpack.c.b16 %v408, %v407
      %v420 = vpack.c.b16 %v410, %v409
      %v421 = vpack.c.b16 %v412, %v411
      %v422 = vpack.c.b16 %v414, %v413
      %431 = vmatprep.subr.bf16.mxu0 0
      %432 = vmatpush1.bf16.msra.mxu0 %v422
      %433 = vmatprep.subr.bf16.mxu0 0
      %434 = vmatpush1.bf16.msra.mxu0 %v421
      %435 = vmatprep.subr.bf16.mxu0 0
      %436 = vmatpush1.bf16.msra.mxu0 %v420
      %437 = vmatprep.subr.bf16.mxu0 0
      %438 = vmatpush1.bf16.msra.mxu0 %v419
      %439 = vmatprep.subr.bf16.mxu0 0
      %440 = vmatpush1.bf16.msra.mxu0 %v418
      %441 = vmatprep.subr.bf16.mxu0 0
      %442 = vmatpush1.bf16.msra.mxu0 %v417
      %443 = vmatprep.subr.bf16.mxu0 0
      %444 = vmatpush1.bf16.msra.mxu0 %v416
      %445 = vmatprep.subr.bf16.mxu0 0
      %446 = vmatpush1.bf16.msra.mxu0 %v415
      %447 = vmatprep.subr.bf16.mxu0 0
      %448 = vmatpush2.bf16.msra.mxu0 0
      %449 = vmatprep.subr.bf16.mxu0 0
      %450 = vmatpush2.bf16.msra.mxu0 0
      %451 = vmatprep.subr.bf16.mxu0 0
      %452 = vmatpush2.bf16.msra.mxu0 0
      %453 = vmatprep.subr.bf16.mxu0 0
      %454 = vmatpush2.bf16.msra.mxu0 0
      %455 = vmatprep.subr.bf16.mxu0 0
      %456 = vmatpush2.bf16.msra.mxu0 0
      %457 = vmatprep.subr.bf16.mxu0 0
      %458 = vmatpush2.bf16.msra.mxu0 0
      %459 = vmatprep.subr.bf16.mxu0 0
      %460 = vmatpush2.bf16.msra.mxu0 0
      %461 = vmatprep.subr.bf16.mxu0 0
      %462 = vmatpush2.bf16.msra.mxu0 0
      %463 = vmatprep.mubr.bf16.mxu0 0
      %464 = vmatmul.mubr.bf16.gmra.mxu0 %v363
      %v465 = vpop.f32.mrf.mxu0
      %v466 = vadd.f32 %v323, %v465
      %v467 = vpop.f32.mrf.mxu0
      %v468 = vpop.f32.mrf.mxu0
      %v469 = vadd.f32 %v323, %v468
      %v470 = vpop.f32.mrf.mxu0
      %471 = vmatprep.mubr.bf16.mxu0 0
      %472 = vmatmul.mubr.bf16.gmra.mxu0 %v364
      %v473 = vpop.f32.mrf.mxu0
      %v474 = vadd.f32 %v323, %v473
      %v475 = vpop.f32.mrf.mxu0
      %v476 = vpop.f32.mrf.mxu0
      %v477 = vadd.f32 %v323, %v476
      %v478 = vpop.f32.mrf.mxu0
      %479 = vmatprep.mubr.bf16.mxu0 0
      %480 = vmatmul.mubr.bf16.gmra.mxu0 %v365
      %v481 = vpop.f32.mrf.mxu0
      %v482 = vadd.f32 %v323, %v481
      %v483 = vpop.f32.mrf.mxu0
      %v484 = vpop.f32.mrf.mxu0
      %v485 = vadd.f32 %v323, %v484
      %v486 = vpop.f32.mrf.mxu0
      %487 = vmatprep.mubr.bf16.mxu0 0
      %488 = vmatmul.mubr.bf16.gmra.mxu0 %v366
      %v489 = vpop.f32.mrf.mxu0
      %v490 = vadd.f32 %v323, %v489
      %v491 = vpop.f32.mrf.mxu0
      %v492 = vpop.f32.mrf.mxu0
      %v493 = vadd.f32 %v323, %v492
      %v494 = vpop.f32.mrf.mxu0
      %495 = vmatprep.mubr.bf16.mxu0 0
      %496 = vmatmul.mubr.bf16.gmra.mxu0 %v367
      %v497 = vpop.f32.mrf.mxu0
      %v498 = vadd.f32 %v323, %v497
      %v499 = vpop.f32.mrf.mxu0
      %v500 = vpop.f32.mrf.mxu0
      %v501 = vadd.f32 %v323, %v500
      %v502 = vpop.f32.mrf.mxu0
      %503 = vmatprep.mubr.bf16.mxu0 0
      %504 = vmatmul.mubr.bf16.gmra.mxu0 %v368
      %v505 = vpop.f32.mrf.mxu0
      %v506 = vadd.f32 %v323, %v505
      %v507 = vpop.f32.mrf.mxu0
      %v508 = vpop.f32.mrf.mxu0
      %v509 = vadd.f32 %v323, %v508
      %v510 = vpop.f32.mrf.mxu0
      %511 = vmatprep.mubr.bf16.mxu0 0
      %512 = vmatmul.mubr.bf16.gmra.mxu0 %v369
      %v513 = vpop.f32.mrf.mxu0
      %v514 = vadd.f32 %v323, %v513
      %v515 = vpop.f32.mrf.mxu0
      %v516 = vpop.f32.mrf.mxu0
      %v517 = vadd.f32 %v323, %v516
      %v518 = vpop.f32.mrf.mxu0
      %519 = vmatprep.mubr.bf16.mxu0 0
      %520 = vmatmul.mubr.bf16.gmra.mxu0 %v370
      %v521 = vpop.f32.mrf.mxu0
      %v522 = vadd.f32 %v323, %v521
      %v523 = vpop.f32.mrf.mxu0
      %v524 = vpop.f32.mrf.mxu0
      %v525 = vadd.f32 %v323, %v524
      %v526 = vpop.f32.mrf.mxu0
      %527 = vmatprep.mubr.bf16.mxu0 0
      %528 = vmatmul.mubr.bf16.gmra.mxu0 %v371
      %v529 = vpop.f32.mrf.mxu0
      %v530 = vadd.f32 %v323, %v529
      %v531 = vpop.f32.mrf.mxu0
      %v532 = vpop.f32.mrf.mxu0
      %v533 = vadd.f32 %v323, %v532
      %v534 = vpop.f32.mrf.mxu0
      %535 = vmatprep.mubr.bf16.mxu0 0
      %536 = vmatmul.mubr.bf16.gmra.mxu0 %v372
      %v537 = vpop.f32.mrf.mxu0
      %v538 = vadd.f32 %v323, %v537
      %v539 = vpop.f32.mrf.mxu0
      %v540 = vpop.f32.mrf.mxu0
      %v541 = vpop.f32.mrf.mxu0
      %542 = vdwg.mxu0
      %v543 = vmax.f32 %v466, 0.0
      %v544 = vmax.f32 %v469, 0.0
      %v545 = vmax.f32 %v474, 0.0
      %v546 = vmax.f32 %v477, 0.0
      %v547 = vmax.f32 %v482, 0.0
      %v548 = vmax.f32 %v485, 0.0
      %v549 = vmax.f32 %v490, 0.0
      %v550 = vmax.f32 %v493, 0.0
      %v551 = vmax.f32 %v498, 0.0
      %v552 = vmax.f32 %v501, 0.0
      %v553 = vmax.f32 %v506, 0.0
      %v554 = vmax.f32 %v509, 0.0
      %v555 = vmax.f32 %v514, 0.0
      %v556 = vmax.f32 %v517, 0.0
      %v557 = vmax.f32 %v522, 0.0
      %v558 = vmax.f32 %v525, 0.0
      %v559 = vmax.f32 %v530, 0.0
      %v560 = vmax.f32 %v533, 0.0
      %v561 = vmax.f32 %v538, 0.0
      %v562 = vpack.c.bf16 %v544, %v543
      %v563 = vpack.c.bf16 %v546, %v545
      %v564 = vpack.c.bf16 %v548, %v547
      %v565 = vpack.c.bf16 %v550, %v549
      %v566 = vpack.c.bf16 %v552, %v551
      %v567 = vpack.c.bf16 %v554, %v553
      %v568 = vpack.c.bf16 %v556, %v555
      %v569 = vpack.c.bf16 %v558, %v557
      %v570 = vpack.c.bf16 %v560, %v559
      %v571 = vpack.c.bf16 %v561, %v561
      %v572 = vld [vmem:[%s3] sm:$0xf]
      %v573 = vld [vmem:[%s3 + $0x4] sm:$0xf]
      %v574 = vld [vmem:[%s3 + $0x8] sm:$0xf]
      %v575 = vld [vmem:[%s3 + $0xc] sm:$0xf]
      %v576 = vld [vmem:[%s3 + $0x10] sm:$0xf]
      %v577 = vld [vmem:[%s3 + $0x14] sm:$0xf]
      %v578 = vld [vmem:[%s3 + $0x18] sm:$0xf]
      %v579 = vld [vmem:[%s3 + $0x1c] sm:$0xf]
      %v580 = vld [vmem:[%s3 + $0x20] sm:$0xf]
      %v581 = vld [vmem:[%s3 + $0x24] sm:$0xf]
      %v582 = vld [vmem:[%s3 + $0x28] sm:$0xf]
      %v583 = vld [vmem:[%s3 + $0x2c] sm:$0xf]
      %v584 = vld [vmem:[%s3 + $0x30] sm:$0xf]
      %v585 = vld [vmem:[%s3 + $0x34] sm:$0xf]
      %v586 = vld [vmem:[%s3 + $0x38] sm:$0xf]
      %v587 = vld [vmem:[%s3 + $0x3c] sm:$0xf]
      %v588 = vld [vmem:[%s4] sm:$0x1]
      %v590 = vlaneseq
      %v591 = vshrl.u32 %v590, 7
      %v592 = vsub.s32 0, %v591
      %v593 = vrot.slane %v588, %v592
      %v611 = vunpack.c.l.b16 %v572
      %v612 = vunpack.c.l.b16 %v573
      %v613 = vunpack.c.l.b16 %v574
      %v614 = vunpack.c.l.b16 %v575
      %v615 = vunpack.c.l.b16 %v576
      %v616 = vunpack.c.l.b16 %v577
      %v617 = vunpack.c.l.b16 %v578
      %v618 = vunpack.c.l.b16 %v579
      %v619 = vunpack.c.l.b16 %v580
      %v620 = vunpack.c.l.b16 %v581
      %v621 = vunpack.c.l.b16 %v582
      %v622 = vunpack.c.l.b16 %v583
      %v623 = vunpack.c.l.b16 %v584
      %v624 = vunpack.c.l.b16 %v585
      %v625 = vunpack.c.l.b16 %v586
      %v626 = vunpack.c.l.b16 %v587
      %v627 = vpack.c.b16 %v612, %v611
      %v628 = vpack.c.b16 %v614, %v613
      %v629 = vpack.c.b16 %v616, %v615
      %v630 = vpack.c.b16 %v618, %v617
      %v631 = vpack.c.b16 %v620, %v619
      %v632 = vpack.c.b16 %v622, %v621
      %v633 = vpack.c.b16 %v624, %v623
      %v634 = vpack.c.b16 %v626, %v625
      %643 = vmatprep.subr.bf16.mxu0 0
      %644 = vmatpush1.bf16.msra.mxu0 %v634
      %645 = vmatprep.subr.bf16.mxu0 0
      %646 = vmatpush1.bf16.msra.mxu0 %v633
      %647 = vmatprep.subr.bf16.mxu0 0
      %648 = vmatpush1.bf16.msra.mxu0 %v632
      %649 = vmatprep.subr.bf16.mxu0 0
      %650 = vmatpush1.bf16.msra.mxu0 %v631
      %651 = vmatprep.subr.bf16.mxu0 0
      %652 = vmatpush1.bf16.msra.mxu0 %v630
      %653 = vmatprep.subr.bf16.mxu0 0
      %654 = vmatpush1.bf16.msra.mxu0 %v629
      %655 = vmatprep.subr.bf16.mxu0 0
      %656 = vmatpush1.bf16.msra.mxu0 %v628
      %657 = vmatprep.subr.bf16.mxu0 0
      %658 = vmatpush1.bf16.msra.mxu0 %v627
      %659 = vmatprep.subr.bf16.mxu0 0
      %660 = vmatpush2.bf16.msra.mxu0 0
      %661 = vmatprep.subr.bf16.mxu0 0
      %662 = vmatpush2.bf16.msra.mxu0 0
      %663 = vmatprep.subr.bf16.mxu0 0
      %664 = vmatpush2.bf16.msra.mxu0 0
      %665 = vmatprep.subr.bf16.mxu0 0
      %666 = vmatpush2.bf16.msra.mxu0 0
      %667 = vmatprep.subr.bf16.mxu0 0
      %668 = vmatpush2.bf16.msra.mxu0 0
      %669 = vmatprep.subr.bf16.mxu0 0
      %670 = vmatpush2.bf16.msra.mxu0 0
      %671 = vmatprep.subr.bf16.mxu0 0
      %672 = vmatpush2.bf16.msra.mxu0 0
      %673 = vmatprep.subr.bf16.mxu0 0
      %674 = vmatpush2.bf16.msra.mxu0 0
      %675 = vmatprep.mubr.bf16.mxu0 0
      %676 = vmatmul.mubr.bf16.gmra.mxu0 %v562
      %v677 = vpop.f32.mrf.mxu0
      %v678 = vadd.f32 %v593, %v677
      %v679 = vpop.f32.mrf.mxu0
      %v680 = vpop.f32.mrf.mxu0
      %v681 = vadd.f32 %v593, %v680
      %v682 = vpop.f32.mrf.mxu0
      %683 = vmatprep.mubr.bf16.mxu0 0
      %684 = vmatmul.mubr.bf16.gmra.mxu0 %v563
      %v685 = vpop.f32.mrf.mxu0
      %v686 = vadd.f32 %v593, %v685
      %v687 = vpop.f32.mrf.mxu0
      %v688 = vpop.f32.mrf.mxu0
      %v689 = vadd.f32 %v593, %v688
      %v690 = vpop.f32.mrf.mxu0
      %691 = vmatprep.mubr.bf16.mxu0 0
      %692 = vmatmul.mubr.bf16.gmra.mxu0 %v564
      %v693 = vpop.f32.mrf.mxu0
      %v694 = vadd.f32 %v593, %v693
      %v695 = vpop.f32.mrf.mxu0
      %v696 = vpop.f32.mrf.mxu0
      %v697 = vadd.f32 %v593, %v696
      %v698 = vpop.f32.mrf.mxu0
      %699 = vmatprep.mubr.bf16.mxu0 0
      %700 = vmatmul.mubr.bf16.gmra.mxu0 %v565
      %v701 = vpop.f32.mrf.mxu0
      %v702 = vadd.f32 %v593, %v701
      %v703 = vpop.f32.mrf.mxu0
      %v704 = vpop.f32.mrf.mxu0
      %v705 = vadd.f32 %v593, %v704
      %v706 = vpop.f32.mrf.mxu0
      %707 = vmatprep.mubr.bf16.mxu0 0
      %708 = vmatmul.mubr.bf16.gmra.mxu0 %v566
      %v709 = vpop.f32.mrf.mxu0
      %v710 = vadd.f32 %v593, %v709
      %v711 = vpop.f32.mrf.mxu0
      %v712 = vpop.f32.mrf.mxu0
      %v713 = vadd.f32 %v593, %v712
      %v714 = vpop.f32.mrf.mxu0
      %715 = vmatprep.mubr.bf16.mxu0 0
      %716 = vmatmul.mubr.bf16.gmra.mxu0 %v567
      %v717 = vpop.f32.mrf.mxu0
      %v718 = vadd.f32 %v593, %v717
      %v719 = vpop.f32.mrf.mxu0
      %v720 = vpop.f32.mrf.mxu0
      %v721 = vadd.f32 %v593, %v720
      %v722 = vpop.f32.mrf.mxu0
      %723 = vmatprep.mubr.bf16.mxu0 0
      %724 = vmatmul.mubr.bf16.gmra.mxu0 %v568
      %v725 = vpop.f32.mrf.mxu0
      %v726 = vadd.f32 %v593, %v725
      %v727 = vpop.f32.mrf.mxu0
      %v728 = vpop.f32.mrf.mxu0
      %v729 = vadd.f32 %v593, %v728
      %v730 = vpop.f32.mrf.mxu0
      %731 = vmatprep.mubr.bf16.mxu0 0
      %732 = vmatmul.mubr.bf16.gmra.mxu0 %v569
      %v733 = vpop.f32.mrf.mxu0
      %v734 = vadd.f32 %v593, %v733
      %v735 = vpop.f32.mrf.mxu0
      %v736 = vpop.f32.mrf.mxu0
      %v737 = vadd.f32 %v593, %v736
      %v738 = vpop.f32.mrf.mxu0
      %739 = vmatprep.mubr.bf16.mxu0 0
      %740 = vmatmul.mubr.bf16.gmra.mxu0 %v570
      %v741 = vpop.f32.mrf.mxu0
      %v742 = vadd.f32 %v593, %v741
      %v743 = vpop.f32.mrf.mxu0
      %v744 = vpop.f32.mrf.mxu0
      %v745 = vadd.f32 %v593, %v744
      %v746 = vpop.f32.mrf.mxu0
      %747 = vmatprep.mubr.bf16.mxu0 0
      %748 = vmatmul.mubr.bf16.gmra.mxu0 %v571
      %v749 = vpop.f32.mrf.mxu0
      %v750 = vadd.f32 %v593, %v749
      %v751 = vpop.f32.mrf.mxu0
      %v752 = vpop.f32.mrf.mxu0
      %v753 = vpop.f32.mrf.mxu0
      %754 = vdwg.mxu0
      %v755 = vmax.f32 %v678, 0.0
      %v756 = vmax.f32 %v681, 0.0
      %v757 = vmax.f32 %v686, 0.0
      %v758 = vmax.f32 %v689, 0.0
      %v759 = vmax.f32 %v694, 0.0
      %v760 = vmax.f32 %v697, 0.0
      %v761 = vmax.f32 %v702, 0.0
      %v762 = vmax.f32 %v705, 0.0
      %v763 = vmax.f32 %v710, 0.0
      %v764 = vmax.f32 %v713, 0.0
      %v765 = vmax.f32 %v718, 0.0
      %v766 = vmax.f32 %v721, 0.0
      %v767 = vmax.f32 %v726, 0.0
      %v768 = vmax.f32 %v729, 0.0
      %v769 = vmax.f32 %v734, 0.0
      %v770 = vmax.f32 %v737, 0.0
      %v771 = vmax.f32 %v742, 0.0
      %v772 = vmax.f32 %v745, 0.0
      %v773 = vmax.f32 %v750, 0.0
      %v774 = vpack.c.bf16 %v756, %v755
      %v775 = vpack.c.bf16 %v758, %v757
      %v776 = vpack.c.bf16 %v760, %v759
      %v777 = vpack.c.bf16 %v762, %v761
      %v778 = vpack.c.bf16 %v764, %v763
      %v779 = vpack.c.bf16 %v766, %v765
      %v780 = vpack.c.bf16 %v768, %v767
      %v781 = vpack.c.bf16 %v770, %v769
      %v782 = vpack.c.bf16 %v772, %v771
      %v783 = vpack.c.bf16 %v773, %v773
      %v784 = vld [vmem:[%s5] sm:$0xf]
      %v785 = vld [vmem:[%s5 + $0x4] sm:$0xf]
      %v786 = vld [vmem:[%s5 + $0x8] sm:$0xf]
      %v787 = vld [vmem:[%s5 + $0xc] sm:$0xf]
      %v788 = vld [vmem:[%s5 + $0x10] sm:$0xf]
      %v789 = vld [vmem:[%s5 + $0x14] sm:$0xf]
      %v790 = vld [vmem:[%s5 + $0x18] sm:$0xf]
      %v791 = vld [vmem:[%s5 + $0x1c] sm:$0xf]
      %v792 = vld [vmem:[%s5 + $0x20] sm:$0xf]
      %v793 = vld [vmem:[%s5 + $0x24] sm:$0xf]
      %v794 = vld [vmem:[%s5 + $0x28] sm:$0xf]
      %v795 = vld [vmem:[%s5 + $0x2c] sm:$0xf]
      %v796 = vld [vmem:[%s5 + $0x30] sm:$0xf]
      %v797 = vld [vmem:[%s5 + $0x34] sm:$0xf]
      %v798 = vld [vmem:[%s5 + $0x38] sm:$0xf]
      %v799 = vld [vmem:[%s5 + $0x3c] sm:$0xf]
      %v800 = vld [vmem:[%s6] sm:$0x1]
      %v802 = vlaneseq
      %v803 = vshrl.u32 %v802, 7
      %v804 = vsub.s32 0, %v803
      %v805 = vrot.slane %v800, %v804
      %v823 = vunpack.c.l.b16 %v784
      %v824 = vunpack.c.l.b16 %v785
      %v825 = vunpack.c.l.b16 %v786
      %v826 = vunpack.c.l.b16 %v787
      %v827 = vunpack.c.l.b16 %v788
      %v828 = vunpack.c.l.b16 %v789
      %v829 = vunpack.c.l.b16 %v790
      %v830 = vunpack.c.l.b16 %v791
      %v831 = vunpack.c.l.b16 %v792
      %v832 = vunpack.c.l.b16 %v793
      %v833 = vunpack.c.l.b16 %v794
      %v834 = vunpack.c.l.b16 %v795
      %v835 = vunpack.c.l.b16 %v796
      %v836 = vunpack.c.l.b16 %v797
      %v837 = vunpack.c.l.b16 %v798
      %v838 = vunpack.c.l.b16 %v799
      %v839 = vpack.c.b16 %v824, %v823
      %v840 = vpack.c.b16 %v826, %v825
      %v841 = vpack.c.b16 %v828, %v827
      %v842 = vpack.c.b16 %v830, %v829
      %v843 = vpack.c.b16 %v832, %v831
      %v844 = vpack.c.b16 %v834, %v833
      %v845 = vpack.c.b16 %v836, %v835
      %v846 = vpack.c.b16 %v838, %v837
      %855 = vmatprep.subr.bf16.mxu0 0
      %856 = vmatpush1.bf16.msra.mxu0 %v846
      %857 = vmatprep.subr.bf16.mxu0 0
      %858 = vmatpush1.bf16.msra.mxu0 %v845
      %859 = vmatprep.subr.bf16.mxu0 0
      %860 = vmatpush1.bf16.msra.mxu0 %v844
      %861 = vmatprep.subr.bf16.mxu0 0
      %862 = vmatpush1.bf16.msra.mxu0 %v843
      %863 = vmatprep.subr.bf16.mxu0 0
      %864 = vmatpush1.bf16.msra.mxu0 %v842
      %865 = vmatprep.subr.bf16.mxu0 0
      %866 = vmatpush1.bf16.msra.mxu0 %v841
      %867 = vmatprep.subr.bf16.mxu0 0
      %868 = vmatpush1.bf16.msra.mxu0 %v840
      %869 = vmatprep.subr.bf16.mxu0 0
      %870 = vmatpush1.bf16.msra.mxu0 %v839
      %871 = vmatprep.subr.bf16.mxu0 0
      %872 = vmatpush2.bf16.msra.mxu0 0
      %873 = vmatprep.subr.bf16.mxu0 0
      %874 = vmatpush2.bf16.msra.mxu0 0
      %875 = vmatprep.subr.bf16.mxu0 0
      %876 = vmatpush2.bf16.msra.mxu0 0
      %877 = vmatprep.subr.bf16.mxu0 0
      %878 = vmatpush2.bf16.msra.mxu0 0
      %879 = vmatprep.subr.bf16.mxu0 0
      %880 = vmatpush2.bf16.msra.mxu0 0
      %881 = vmatprep.subr.bf16.mxu0 0
      %882 = vmatpush2.bf16.msra.mxu0 0
      %883 = vmatprep.subr.bf16.mxu0 0
      %884 = vmatpush2.bf16.msra.mxu0 0
      %885 = vmatprep.subr.bf16.mxu0 0
      %886 = vmatpush2.bf16.msra.mxu0 0
      %887 = vmatprep.mubr.bf16.mxu0 0
      %888 = vmatmul.mubr.bf16.gmra.mxu0 %v774
      %v889 = vpop.f32.mrf.mxu0
      %v890 = vadd.f32 %v805, %v889
      %v891 = vpop.f32.mrf.mxu0
      %v892 = vpop.f32.mrf.mxu0
      %v893 = vadd.f32 %v805, %v892
      %v894 = vpop.f32.mrf.mxu0
      %895 = vmatprep.mubr.bf16.mxu0 0
      %896 = vmatmul.mubr.bf16.gmra.mxu0 %v775
      %v897 = vpop.f32.mrf.mxu0
      %v898 = vadd.f32 %v805, %v897
      %v899 = vpop.f32.mrf.mxu0
      %v900 = vpop.f32.mrf.mxu0
      %v901 = vadd.f32 %v805, %v900
      %v902 = vpop.f32.mrf.mxu0
      %903 = vmatprep.mubr.bf16.mxu0 0
      %904 = vmatmul.mubr.bf16.gmra.mxu0 %v776
      %v905 = vpop.f32.mrf.mxu0
      %v906 = vadd.f32 %v805, %v905
      %v907 = vpop.f32.mrf.mxu0
      %v908 = vpop.f32.mrf.mxu0
      %v909 = vadd.f32 %v805, %v908
      %v910 = vpop.f32.mrf.mxu0
      %911 = vmatprep.mubr.bf16.mxu0 0
      %912 = vmatmul.mubr.bf16.gmra.mxu0 %v777
      %v913 = vpop.f32.mrf.mxu0
      %v914 = vadd.f32 %v805, %v913
      %v915 = vpop.f32.mrf.mxu0
      %v916 = vpop.f32.mrf.mxu0
      %v917 = vadd.f32 %v805, %v916
      %v918 = vpop.f32.mrf.mxu0
      %919 = vmatprep.mubr.bf16.mxu0 0
      %920 = vmatmul.mubr.bf16.gmra.mxu0 %v778
      %v921 = vpop.f32.mrf.mxu0
      %v922 = vadd.f32 %v805, %v921
      %v923 = vpop.f32.mrf.mxu0
      %v924 = vpop.f32.mrf.mxu0
      %v925 = vadd.f32 %v805, %v924
      %v926 = vpop.f32.mrf.mxu0
      %927 = vmatprep.mubr.bf16.mxu0 0
      %928 = vmatmul.mubr.bf16.gmra.mxu0 %v779
      %v929 = vpop.f32.mrf.mxu0
      %v930 = vadd.f32 %v805, %v929
      %v931 = vpop.f32.mrf.mxu0
      %v932 = vpop.f32.mrf.mxu0
      %v933 = vadd.f32 %v805, %v932
      %v934 = vpop.f32.mrf.mxu0
      %935 = vmatprep.mubr.bf16.mxu0 0
      %936 = vmatmul.mubr.bf16.gmra.mxu0 %v780
      %v937 = vpop.f32.mrf.mxu0
      %v938 = vadd.f32 %v805, %v937
      %v939 = vpop.f32.mrf.mxu0
      %v940 = vpop.f32.mrf.mxu0
      %v941 = vadd.f32 %v805, %v940
      %v942 = vpop.f32.mrf.mxu0
      %943 = vmatprep.mubr.bf16.mxu0 0
      %944 = vmatmul.mubr.bf16.gmra.mxu0 %v781
      %v945 = vpop.f32.mrf.mxu0
      %v946 = vadd.f32 %v805, %v945
      %v947 = vpop.f32.mrf.mxu0
      %v948 = vpop.f32.mrf.mxu0
      %v949 = vadd.f32 %v805, %v948
      %v950 = vpop.f32.mrf.mxu0
      %951 = vmatprep.mubr.bf16.mxu0 0
      %952 = vmatmul.mubr.bf16.gmra.mxu0 %v782
      %v953 = vpop.f32.mrf.mxu0
      %v954 = vadd.f32 %v805, %v953
      %v955 = vpop.f32.mrf.mxu0
      %v956 = vpop.f32.mrf.mxu0
      %v957 = vadd.f32 %v805, %v956
      %v958 = vpop.f32.mrf.mxu0
      %959 = vmatprep.mubr.bf16.mxu0 0
      %960 = vmatmul.mubr.bf16.gmra.mxu0 %v783
      %v961 = vpop.f32.mrf.mxu0
      %v962 = vadd.f32 %v805, %v961
      %v963 = vpop.f32.mrf.mxu0
      %v964 = vpop.f32.mrf.mxu0
      %v965 = vpop.f32.mrf.mxu0
      %966 = vdwg.mxu0
      %v967 = vlaneseq
      %v968 = vand.u32 %v967, 127
      %vm969 = vcmp.lt.s32.totalorder %v968, 16
      %v970 = vtanh.pop %v890
      %v971 = vtanh.pop %v893
      %v972 = vtanh.pop %v898
      %v973 = vtanh.pop %v901
      %v974 = vtanh.pop %v906
      %v975 = vtanh.pop %v909
      %v976 = vtanh.pop %v914
      %v977 = vtanh.pop %v917
      %v978 = vtanh.pop %v922
      %v979 = vtanh.pop %v925
      %v980 = vtanh.pop %v930
      %v981 = vtanh.pop %v933
      %v982 = vtanh.pop %v938
      %v983 = vtanh.pop %v941
      %v984 = vtanh.pop %v946
      %v985 = vtanh.pop %v949
      %v986 = vtanh.pop %v954
      %v987 = vtanh.pop %v957
      %v988 = vtanh.pop %v962
      %v989 = vsel %vm969, %v970, %v890
      %v990 = vsel %vm969, %v971, %v893
      %v991 = vsel %vm969, %v972, %v898
      %v992 = vsel %vm969, %v973, %v901
      %v993 = vsel %vm969, %v974, %v906
      %v994 = vsel %vm969, %v975, %v909
      %v995 = vsel %vm969, %v976, %v914
      %v996 = vsel %vm969, %v977, %v917
      %v997 = vsel %vm969, %v978, %v922
      %v998 = vsel %vm969, %v979, %v925
      %v999 = vsel %vm969, %v980, %v930
      %v1000 = vsel %vm969, %v981, %v933
      %v1001 = vsel %vm969, %v982, %v938
      %v1002 = vsel %vm969, %v983, %v941
      %v1003 = vsel %vm969, %v984, %v946
      %v1004 = vsel %vm969, %v985, %v949
      %v1005 = vsel %vm969, %v986, %v954
      %v1006 = vsel %vm969, %v987, %v957
      %v1007 = vsel %vm969, %v988, %v962
      %v1008 = vpack.c.bf16 %v990, %v989
      %v1009 = vpack.c.bf16 %v992, %v991
      %v1010 = vpack.c.bf16 %v994, %v993
      %v1011 = vpack.c.bf16 %v996, %v995
      %v1012 = vpack.c.bf16 %v998, %v997
      %v1013 = vpack.c.bf16 %v1000, %v999
      %v1014 = vpack.c.bf16 %v1002, %v1001
      %v1015 = vpack.c.bf16 %v1004, %v1003
      %v1016 = vpack.c.bf16 %v1006, %v1005
      %v1017 = vpack.c.bf16 %v1007, %v1007
      %v1028 = vunpack.c.l.b16 %v1008
      %v1029 = vunpack.c.h.b16 %v1008
      %v1030 = vunpack.c.l.b16 %v1009
      %v1031 = vunpack.c.h.b16 %v1009
      %v1032 = vunpack.c.l.b16 %v1010
      %v1033 = vunpack.c.h.b16 %v1010
      %v1034 = vunpack.c.l.b16 %v1011
      %v1035 = vunpack.c.h.b16 %v1011
      %v1036 = vunpack.c.l.b16 %v1012
      %v1037 = vunpack.c.h.b16 %v1012
      %v1038 = vunpack.c.l.b16 %v1013
      %v1039 = vunpack.c.h.b16 %v1013
      %v1040 = vunpack.c.l.b16 %v1014
      %v1041 = vunpack.c.h.b16 %v1014
      %v1042 = vunpack.c.l.b16 %v1015
      %v1043 = vunpack.c.h.b16 %v1015
      %v1044 = vunpack.c.l.b16 %v1016
      %v1045 = vunpack.c.h.b16 %v1016
      %v1046 = vunpack.c.l.b16 %v1017
      %v1047 = vpack.c.b16 %v1028, %v1028
      %v1048 = vpack.c.b16 %v1029, %v1029
      %v1049 = vpack.c.b16 %v1030, %v1030
      %v1050 = vpack.c.b16 %v1031, %v1031
      %v1051 = vpack.c.b16 %v1032, %v1032
      %v1052 = vpack.c.b16 %v1033, %v1033
      %v1053 = vpack.c.b16 %v1034, %v1034
      %v1054 = vpack.c.b16 %v1035, %v1035
      %v1055 = vpack.c.b16 %v1036, %v1036
      %v1056 = vpack.c.b16 %v1037, %v1037
      %v1057 = vpack.c.b16 %v1038, %v1038
      %v1058 = vpack.c.b16 %v1039, %v1039
      %v1059 = vpack.c.b16 %v1040, %v1040
      %v1060 = vpack.c.b16 %v1041, %v1041
      %v1061 = vpack.c.b16 %v1042, %v1042
      %v1062 = vpack.c.b16 %v1043, %v1043
      %v1063 = vpack.c.b16 %v1044, %v1044
      %v1064 = vpack.c.b16 %v1045, %v1045
      %v1065 = vpack.c.b16 %v1046, %v1046
      %1085 = vst [vmem:[%s280] sm:$0xf] %v1047
      %1086 = vst [vmem:[%s280 + $0x4] sm:$0xf] %v1048
      %1087 = vst [vmem:[%s280 + $0x8] sm:$0xf] %v1049
      %1088 = vst [vmem:[%s280 + $0xc] sm:$0xf] %v1050
      %1089 = vst [vmem:[%s280 + $0x10] sm:$0xf] %v1051
      %1090 = vst [vmem:[%s280 + $0x14] sm:$0xf] %v1052
      %1091 = vst [vmem:[%s280 + $0x18] sm:$0xf] %v1053
      %1092 = vst [vmem:[%s280 + $0x1c] sm:$0xf] %v1054
      %1093 = vst [vmem:[%s280 + $0x20] sm:$0xf] %v1055
      %1094 = vst [vmem:[%s280 + $0x24] sm:$0xf] %v1056
      %1095 = vst [vmem:[%s280 + $0x28] sm:$0xf] %v1057
      %1096 = vst [vmem:[%s280 + $0x2c] sm:$0xf] %v1058
      %1097 = vst [vmem:[%s280 + $0x30] sm:$0xf] %v1059
      %1098 = vst [vmem:[%s280 + $0x34] sm:$0xf] %v1060
      %1099 = vst [vmem:[%s280 + $0x38] sm:$0xf] %v1061
      %1100 = vst [vmem:[%s280 + $0x3c] sm:$0xf] %v1062
      %1101 = vst [vmem:[%s280 + $0x40] sm:$0xf] %v1063
      %1102 = vst [vmem:[%s280 + $0x44] sm:$0xf] %v1064
      %1103 = vst [vmem:[%s280 + $0x48] sm:$0xf] %v1065
      %s1104 = smul.u32 19, %s18
      %p1105 = scmp.lt.s32.totalorder %s1104, 37
      %s1106 = scalar_select %p1105, %s1104, 37
      %s1107 = smul.addr %s1106, 4
      %s1108 = scalar_lea.vmem %s7, %s1107
      // Predicated region
      $region49: #{nn_forward.1} parent=47 // pred_check
        %p1109 = pneg %p188
      $region50: #{nn_forward.1} parent=47 // pred_check_branch
        %1111 = sbr.rel (%p1109) target = $region52
      $region51: #{nn_forward.1} parent=47 // pred_region
        %s1112 = smul.u32 19, %s18
      $region52: #{nn_forward.1} parent=47 // pred_fallthru
        _
    $region48: #{nn_forward.1} parent=5 // pred_fallthru
      _
    %p1113 = scmp.le.s32.totalorder 2, %s13
    // Predicated region
    $region53: #{nn_forward.1} parent=5 // pred_check
      %p1114 = pneg %p1113
    $region54: #{nn_forward.1} parent=5 // pred_check_branch
      %1116 = sbr.rel (%p1114) target = $region56
    $region55: #{nn_forward.1} parent=5 // pred_region
      %s1117 = ssub.s32 %s13, 2
      // Predicated region
      $region57: #{nn_forward.1} parent=55 // pred_check
        %p1118 = pneg %p194
      $region58: #{nn_forward.1} parent=55 // pred_check_branch
        %1120 = sbr.rel (%p1118) target = $region60
      $region59: #{nn_forward.1} parent=55 // pred_region
        %s1121 = smul.u32 19, %s19
        %p1122 = scmp.lt.s32.totalorder %s1121, 37
        %s1123 = scalar_select %p1122, %s1121, 37
        %s1124 = smul.addr %s1123, 4
        %s1125 = scalar_lea.vmem %s7, %s1124
      $region60: #{nn_forward.1} parent=55 // pred_fallthru
        _
    $region56: #{nn_forward.1} parent=5 // pred_fallthru
      _
  $region6: #{nn_forward.1} parent=0 // loop_footer
    %s17 = sadd.s32 1, %s13
  $region7: #{nn_forward.1} parent=0 // loop_footer_branch
    %12 = sbr.rel target = $region3
  $region8: #{nn_forward.1} parent=0 // loop_exit
    _

</llo_original>
